<compile_context>
chip_gen: v6e
topology: v6e:2x2x1
jax: 0.10.0
libtpu: 0.0.40
codegen_flags: <defaults>
</compile_context>

<pallas_src>
import math
from functools import partial

import jax
import jax.numpy as jnp
from jax.experimental import pallas as pl
from jax.experimental.pallas import tpu as pltpu


def _round_up(x, m):
    return ((x + m - 1) // m) * m


# ---------------------------------------------------------------------------
# One-time, cached hardware / capability probes (never per-call).
# ---------------------------------------------------------------------------
_VMEM_BUDGET = None


def _vmem_budget_bytes():
    """~75% of this chip's physical per-core VMEM (v5e/v6e: 128 MiB, v7x: 64 MiB).
    Falls back to the smallest generation (64 MiB) if the query is unavailable,
    so the default limit is never over physical budget anywhere."""
    global _VMEM_BUDGET
    if _VMEM_BUDGET is None:
        try:
            cap = int(pltpu.get_tpu_info().vmem_capacity_bytes)
        except Exception:
            cap = 64 * 1024 * 1024
        _VMEM_BUDGET = (3 * cap) // 4
    return _VMEM_BUDGET


_BUFFERED1_OK = None


def _buffered_one_supported():
    """Cached one-time probe: does this jax build accept
    pipeline_mode=pl.Buffered(1) (single-buffering of grid-invariant weights)?
    Runs one trivial 8x128 copy kernel once; the real FFN kernel call is never
    wrapped in a try/except."""
    global _BUFFERED1_OK
    if _BUFFERED1_OK is None:
        def _copy(x_ref, o_ref):
            o_ref[...] = x_ref[...]
        try:
            fn = pl.pallas_call(
                _copy,
                out_shape=jax.ShapeDtypeStruct((8, 128), jnp.float32),
                grid=(1,),
                in_specs=[pl.BlockSpec((8, 128), lambda i: (0, 0),
                                       pipeline_mode=pl.Buffered(1))],
                out_specs=pl.BlockSpec((8, 128), lambda i: (0, 0)),
            )
            jax.block_until_ready(jax.jit(fn)(jnp.zeros((8, 128), jnp.float32)))
            _BUFFERED1_OK = True
        except Exception:
            _BUFFERED1_OK = False
    return _BUFFERED1_OK


# ---------------------------------------------------------------------------
# Kernels
# ---------------------------------------------------------------------------
def _ffn_kernel_resident(x_ref, w1_ref, b1_ref, w2_ref, b2_ref, o_ref):
    # x_ref:  (TM, D) in the caller's dtype -- cast in-kernel (saves one full
    #         HBM pass that a wrapper-side cast would add).
    # w1_ref: (D, H) resident, compute dtype;  b1_ref: (1, H) f32
    # w2_ref: (H, D) resident, compute dtype;  b2_ref: (1, D) f32
    x = x_ref[...].astype(w1_ref.dtype)
    h = jnp.dot(x, w1_ref[...], preferred_element_type=jnp.float32) + b1_ref[...]
    h = jnp.maximum(h, 0.0)                     # ReLU
    # dropout: inference mode -> identity
    y = jnp.dot(h.astype(w2_ref.dtype), w2_ref[...],
                preferred_element_type=jnp.float32) + b2_ref[...]
    o_ref[...] = y.astype(o_ref.dtype)


def _ffn_kernel_hidden_tiled(hidden, x_ref, w1_ref, b1_ref, w2_ref, b2_ref,
                             o_ref, acc_ref):
    # Grid: (row tiles i [parallel], hidden chunks k [arbitrary]).
    # x_ref: (TM, D)   w1_ref: (D, TH) col chunk   b1_ref: (1, TH) chunk
    # w2_ref: (TH, D) row chunk   b2_ref: (1, D)   acc_ref: (TM, D) f32 scratch
    k = pl.program_id(1)
    nk = pl.num_programs(1)

    @pl.when(k == 0)
    def _():
        acc_ref[...] = jnp.zeros_like(acc_ref)

    x = x_ref[...].astype(w1_ref.dtype)
    h = jnp.dot(x, w1_ref[...], preferred_element_type=jnp.float32) + b1_ref[...]
    h = jnp.maximum(h, 0.0)

    w2 = w2_ref[...]
    th = h.shape[1]
    if hidden % th != 0:
        # Ragged last hidden chunk: zero both the garbage h columns and the
        # garbage W2 rows so stale VMEM (possibly NaN bit patterns) never
        # contaminates the accumulator.
        base = k * th
        hcol = jax.lax.broadcasted_iota(jnp.int32, h.shape, 1) + base
        h = jnp.where(hcol < hidden, h, 0.0)
        wrow = jax.lax.broadcasted_iota(jnp.int32, w2.shape, 0) + base
        w2 = jnp.where(wrow < hidden, w2, jnp.zeros_like(w2))

    acc_ref[...] += jnp.dot(h.astype(w2.dtype), w2,
                            preferred_element_type=jnp.float32)

    @pl.when(k == nk - 1)
    def _():
        o_ref[...] = (acc_ref[...] + b2_ref[...]).astype(o_ref.dtype)


# ---------------------------------------------------------------------------
# Wrapper
# ---------------------------------------------------------------------------
def prepare_ffn_params(w1, b1, w2, b2, compute_dtype=jnp.bfloat16):
    """One-time parameter prep (hoist out of the per-step call): cast the
    weights to the MXU compute dtype and reshape biases to (1, N) float32."""
    d_model, hidden = w1.shape
    return (w1.astype(compute_dtype),
            b1.astype(jnp.float32).reshape(1, hidden),
            w2.astype(compute_dtype),
            b2.astype(jnp.float32).reshape(1, d_model))


def positionwise_ffn(x, w1, b1, w2, b2, *,
                     tile_rows=None,
                     hidden_tile=None,
                     compute_dtype=jnp.bfloat16,
                     out_dtype=None,
                     vmem_limit_bytes=None):
    """y = fc2(dropout(relu(fc1(x)))), dropout = identity (inference mode).

    x : [..., d_model] (linear over the last dim, like nn.Linear)
    w1: [d_model, hidden] ([in, out]),   b1: [hidden] or [1, hidden]
    w2: [hidden, d_model],               b2: [d_model] or [1, d_model]

    For best performance pass weights already cast via prepare_ffn_params()
    (otherwise they are cast here on every call).  bf16 weights + f32
    accumulation is the right operating point on v5e/v6e/v7x alike; pass
    compute_dtype=jnp.float32 only for numerics studies.  Pass
    out_dtype=jnp.bfloat16 when the consumer accepts it (halves write traffic).
    """
    *lead, d_model = x.shape
    d_in, hidden = w1.shape
    assert d_in == d_model and w2.shape == (hidden, d_model)
    assert b1.size == hidden and b2.size == d_model

    rows = math.prod(lead) if lead else 1
    out_dtype = x.dtype if out_dtype is None else out_dtype

    # Weights: cast only if the caller did not pre-cast (see prepare_ffn_params).
    if w1.dtype != compute_dtype:
        w1 = w1.astype(compute_dtype)
    if w2.dtype != compute_dtype:
        w2 = w2.astype(compute_dtype)
    b1 = b1.astype(jnp.float32).reshape(1, hidden)
    b2 = b2.astype(jnp.float32).reshape(1, d_model)

    x2d = x.reshape(rows, d_model)              # layout-only reshape, no copy

    in_size = jnp.dtype(x.dtype).itemsize
    c_size = jnp.dtype(compute_dtype).itemsize
    o_size = jnp.dtype(out_dtype).itemsize

    budget = vmem_limit_bytes if vmem_limit_bytes is not None else _vmem_budget_bytes()
    w_bytes = 2 * d_model * hidden * c_size + (hidden + d_model) * 4

    def _resident_need(tm_):
        return (w_bytes
                + 2 * tm_ * d_model * (in_size + o_size)   # double-buffered x / out tiles
                + tm_ * hidden * 4                          # f32 intermediate h
                + 2 * tm_ * d_model * 4)                    # f32 y + headroom

    # Row tile: largest of {512, 256, 128} whose resident footprint fits ~80%
    # of the budget (v6e picks 512; the smaller v7x budget backs off to 256/128).
    if tile_rows is None:
        tile_rows = 128
        for cand in (512, 256, 128):
            if _resident_need(cand) <= 0.8 * budget:
                tile_rows = cand
                break
    tm = max(8, min(tile_rows, _round_up(rows, 8)))
    grid_rows = pl.cdiv(rows, tm)

    use_hidden_tiling = hidden_tile is not None
    if not use_hidden_tiling and hidden >= 256 and _resident_need(tm) > 0.8 * budget:
        use_hidden_tiling = True                # resident weights won't fit (e.g. v7x)

    cost = pl.CostEstimate(
        flops=4 * rows * d_model * hidden,      # two matmuls
        transcendentals=0,
        bytes_accessed=rows * d_model * (in_size + o_size) + w_bytes)
    cparams = lambda sem: pltpu.CompilerParams(dimension_semantics=sem,
                                               vmem_limit_bytes=int(budget))

    if not use_hidden_tiling:
        # Fully fused: both weight matrices resident (single-buffered when the
        # jax build supports Buffered(1) on grid-invariant operands).
        wkw = ({"pipeline_mode": pl.Buffered(1)}
               if _buffered_one_supported() else {})
        grid_spec = pltpu.PrefetchScalarGridSpec(
            num_scalar_prefetch=0,
            grid=(grid_rows,),
            in_specs=[
                pl.BlockSpec((tm, d_model), lambda i: (i, 0)),              # x tile
                pl.BlockSpec((d_model, hidden), lambda i: (0, 0), **wkw),   # W1
                pl.BlockSpec((1, hidden), lambda i: (0, 0), **wkw),         # b1
                pl.BlockSpec((hidden, d_model), lambda i: (0, 0), **wkw),   # W2
                pl.BlockSpec((1, d_model), lambda i: (0, 0), **wkw),        # b2
            ],
            out_specs=pl.BlockSpec((tm, d_model), lambda i: (i, 0)),
        )
        out2d = pl.pallas_call(
            _ffn_kernel_resident,
            out_shape=jax.ShapeDtypeStruct((rows, d_model), out_dtype),
            grid_spec=grid_spec,
            compiler_params=cparams(("parallel",)),
            cost_estimate=cost,
        )(x2d, w1, b1, w2, b2)
    else:
        # Hidden-dim-tiled accumulator path for large FFNs (v7x 64 MiB VMEM):
        # stream W1 column chunks / W2 row chunks; (tm, d_model) f32 accumulator.
        if hidden_tile is None:
            th = 128
            for cand in (2048, 1024, 512, 256, 128):
                per_step = (4 * d_model * cand * c_size      # W1 + W2 chunks, 2-buffered
                            + 2 * cand * 4                    # b1 chunk, 2-buffered
                            + 2 * tm * d_model * (in_size + o_size)
                            + tm * d_model * 4                # f32 accumulator
                            + tm * cand * 4                   # f32 h chunk
                            + 2 * d_model * 4)                # b2
                if per_step <= 0.8 * budget:
                    th = cand
                    break
        else:
            th = max(128, _round_up(hidden_tile, 128))
        th = min(th, _round_up(hidden, 128))
        grid_k = pl.cdiv(hidden, th)

        grid_spec = pltpu.PrefetchScalarGridSpec(
            num_scalar_prefetch=0,
            grid=(grid_rows, grid_k),
            in_specs=[
                pl.BlockSpec((tm, d_model), lambda i, k: (i, 0)),   # x (k-invariant)
                pl.BlockSpec((d_model, th), lambda i, k: (0, k)),   # W1 column chunk
                pl.BlockSpec((1, th), lambda i, k: (0, k)),         # b1 chunk
                pl.BlockSpec((th, d_model), lambda i, k: (k, 0)),   # W2 row chunk
                pl.BlockSpec((1, d_model), lambda i, k: (0, 0)),    # b2
            ],
            out_specs=pl.BlockSpec((tm, d_model), lambda i, k: (i, 0)),
            scratch_shapes=[pltpu.VMEM((tm, d_model), jnp.float32)],
        )
        out2d = pl.pallas_call(
            partial(_ffn_kernel_hidden_tiled, hidden),
            out_shape=jax.ShapeDtypeStruct((rows, d_model), out_dtype),
            grid_spec=grid_spec,
            compiler_params=cparams(("parallel", "arbitrary")),
            cost_estimate=cost,
        )(x2d, w1, b1, w2, b2)

    return out2d.reshape(*lead, d_model)


# ---------------------------------------------------------------------------
# Init / reference (for the self-test)
# ---------------------------------------------------------------------------
def init_params(key, d_model, hidden, dtype=jnp.float32):
    """PyTorch nn.Linear-style init (uniform +-1/sqrt(fan_in)); weights stored
    transposed ([in, out]) for direct use in the kernel."""
    k1, k2, k3, k4 = jax.random.split(key, 4)
    bound1 = 1.0 / math.sqrt(d_model)
    bound2 = 1.0 / math.sqrt(hidden)
    w1 = jax.random.uniform(k1, (d_model, hidden), dtype, -bound1, bound1)
    b1 = jax.random.uniform(k2, (hidden,), dtype, -bound1, bound1)
    w2 = jax.random.uniform(k3, (hidden, d_model), dtype, -bound2, bound2)
    b2 = jax.random.uniform(k4, (d_model,), dtype, -bound2, bound2)
    return w1, b1, w2, b2


def _reference(x, w1, b1, w2, b2, compute_dtype):
    """Plain-JAX reference using the same compute dtype (f32 accumulation)."""
    x2 = x.reshape(-1, x.shape[-1]).astype(compute_dtype)
    h = jnp.dot(x2, w1.astype(compute_dtype),
                preferred_element_type=jnp.float32) + b1.astype(jnp.float32)
    h = jnp.maximum(h, 0.0)
    y = jnp.dot(h.astype(compute_dtype), w2.astype(compute_dtype),
                preferred_element_type=jnp.float32) + b2.astype(jnp.float32)
    return y.reshape(x.shape).astype(x.dtype)


if __name__ == "__main__":
    key = jax.random.PRNGKey(0)

    # --- Test 1: tiny shapes, fused resident-weight path --------------------
    batch, seq, d_model, hidden = 2, 8, 32, 64
    k1, k2 = jax.random.split(key)
    x = jax.random.normal(k1, (batch, seq, d_model), jnp.float32)
    w1, b1, w2, b2 = init_params(k2, d_model, hidden)
    params = prepare_ffn_params(w1, b1, w2, b2)          # one-time weight prep

    out = positionwise_ffn(x, *params)
    out = jax.block_until_ready(out)
    ref = _reference(x, w1, b1, w2, b2, jnp.bfloat16)
    assert out.shape == (batch, seq, d_model)
    assert jnp.allclose(out, ref, atol=2e-2, rtol=2e-2), \
        float(jnp.max(jnp.abs(out - ref)))

    # --- Test 2: ragged rows + hidden-dim-tiled accumulator path ------------
    batch2, seq2, d_model2, hidden2 = 2, 13, 128, 320
    k3, k4 = jax.random.split(k2)
    x2 = jax.random.normal(k3, (batch2, seq2, d_model2), jnp.float32)
    p2 = init_params(k4, d_model2, hidden2)
    params2 = prepare_ffn_params(*p2)
    out2 = positionwise_ffn(x2, *params2, tile_rows=16, hidden_tile=128)
    out2 = jax.block_until_ready(out2)
    ref2 = _reference(x2, *p2, jnp.bfloat16)
    assert out2.shape == (batch2, seq2, d_model2)
    assert jnp.allclose(out2, ref2, atol=2e-2, rtol=2e-2), \
        float(jnp.max(jnp.abs(out2 - ref2)))

    print("KERNEL_OK")
</pallas_src>

<mosaic_0001>
module attributes {stable_mosaic.version = 11 : i64} {
  func.func @_copy(%arg0: i32, %arg1: memref<8x128xf32, #tpu.memory_space<vmem>>, %arg2: memref<8x128xf32, #tpu.memory_space<vmem>>) attributes {dimension_semantics = [#tpu.dimension_semantics<arbitrary>], iteration_bounds = array<i64: 1>, scalar_prefetch = 0 : i64, scratch_operands = 0 : i64, tpu.core_type = #tpu.core_type<tc>, window_params = [{pipeline_mode = #tpu.pipeline_mode<synchronous>, transform_indices = @transform_0, window_bounds = array<i64: 8, 128>}, {pipeline_mode = #tpu.pipeline_mode<synchronous>, transform_indices = @transform_1, window_bounds = array<i64: 8, 128>}]} {
    %c0 = arith.constant 0 : index
    %c0_0 = arith.constant 0 : index
    %0 = vector.load %arg1[%c0, %c0_0] : memref<8x128xf32, #tpu.memory_space<vmem>>, vector<8x128xf32>
    %c0_1 = arith.constant 0 : index
    %c0_2 = arith.constant 0 : index
    %1 = vector.load %arg2[%c0_1, %c0_2] : memref<8x128xf32, #tpu.memory_space<vmem>>, vector<8x128xf32>
    tpu.vector_store %arg2[%c0_1, %c0_2], %0 {strides = array<i32>} : memref<8x128xf32, #tpu.memory_space<vmem>>, vector<8x128xf32>,
    return
  }
  func.func @transform_0(%arg0: i32) -> (i32, i32) {
    %c0_i32 = arith.constant 0 : i32
    %c0_i32_0 = arith.constant 0 : i32
    %c0_i32_1 = arith.constant 0 : i32
    return %c0_i32, %c0_i32_0 : i32, i32
  }
  func.func @transform_1(%arg0: i32) -> (i32, i32) {
    %c0_i32 = arith.constant 0 : i32
    %c0_i32_0 = arith.constant 0 : i32
    %c0_i32_1 = arith.constant 0 : i32
    return %c0_i32, %c0_i32_0 : i32, i32
  }
}

module attributes {stable_mosaic.version = 11 : i64} {
  func.func @_ffn_kernel_resident(%arg0: i32, %arg1: memref<16x32xf32, #tpu.memory_space<vmem>>, %arg2: memref<32x64xbf16, #tpu.memory_space<vmem>>, %arg3: memref<1x64xf32, #tpu.memory_space<vmem>>, %arg4: memref<64x32xbf16, #tpu.memory_space<vmem>>, %arg5: memref<1x32xf32, #tpu.memory_space<vmem>>, %arg6: memref<16x32xf32, #tpu.memory_space<vmem>>) attributes {dimension_semantics = [#tpu.dimension_semantics<parallel>], iteration_bounds = array<i64: 1>, scalar_prefetch = 0 : i64, scratch_operands = 0 : i64, tpu.core_type = #tpu.core_type<tc>, window_params = [{transform_indices = @transform_0, window_bounds = array<i64: 16, 32>}, {pipeline_mode = #tpu.pipeline_mode<synchronous>, transform_indices = @transform_1, window_bounds = array<i64: 32, 64>}, {pipeline_mode = #tpu.pipeline_mode<synchronous>, transform_indices = @transform_2, window_bounds = array<i64: 1, 64>}, {pipeline_mode = #tpu.pipeline_mode<synchronous>, transform_indices = @transform_3, window_bounds = array<i64: 64, 32>}, {pipeline_mode = #tpu.pipeline_mode<synchronous>, transform_indices = @transform_4, window_bounds = array<i64: 1, 32>}, {transform_indices = @transform_5, window_bounds = array<i64: 16, 32>}]} {
    %c0 = arith.constant 0 : index
    %c0_0 = arith.constant 0 : index
    %0 = vector.load %arg1[%c0, %c0_0] : memref<16x32xf32, #tpu.memory_space<vmem>>, vector<16x32xf32>
    %1 = arith.truncf %0 : vector<16x32xf32> to vector<16x32xbf16>
    %c0_1 = arith.constant 0 : index
    %c0_2 = arith.constant 0 : index
    %2 = vector.load %arg2[%c0_1, %c0_2] : memref<32x64xbf16, #tpu.memory_space<vmem>>, vector<32x64xbf16>
    %cst = arith.constant dense<0.000000e+00> : vector<16x64xf32>
    %3 = tpu.matmul %1, %2, %cst {dimension_numbers = #tpu.dot_dimension_numbers<[1], [0], [0], [1], [0, 0, 1, 1], [], []>} : vector<16x32xbf16>, vector<32x64xbf16>, vector<16x64xf32> -> vector<16x64xf32>
    %c0_3 = arith.constant 0 : index
    %c0_4 = arith.constant 0 : index
    %4 = vector.load %arg3[%c0_3, %c0_4] : memref<1x64xf32, #tpu.memory_space<vmem>>, vector<1x64xf32>
    %5 = vector.broadcast %4 : vector<1x64xf32> to vector<16x64xf32>
    %6 = arith.addf %3, %5 : vector<16x64xf32>
    %cst_5 = arith.constant 0.000000e+00 : f32
    %7 = vector.broadcast %cst_5 : f32 to vector<16x64xf32>
    %8 = arith.maximumf %6, %7 : vector<16x64xf32>
    %9 = arith.truncf %8 : vector<16x64xf32> to vector<16x64xbf16>
    %c0_6 = arith.constant 0 : index
    %c0_7 = arith.constant 0 : index
    %10 = vector.load %arg4[%c0_6, %c0_7] : memref<64x32xbf16, #tpu.memory_space<vmem>>, vector<64x32xbf16>
    %cst_8 = arith.constant dense<0.000000e+00> : vector<16x32xf32>
    %11 = tpu.matmul %9, %10, %cst_8 {dimension_numbers = #tpu.dot_dimension_numbers<[1], [0], [0], [1], [0, 0, 1, 1], [], []>} : vector<16x64xbf16>, vector<64x32xbf16>, vector<16x32xf32> -> vector<16x32xf32>
    %c0_9 = arith.constant 0 : index
    %c0_10 = arith.constant 0 : index
    %12 = vector.load %arg5[%c0_9, %c0_10] : memref<1x32xf32, #tpu.memory_space<vmem>>, vector<1x32xf32>
    %13 = vector.broadcast %12 : vector<1x32xf32> to vector<16x32xf32>
    %14 = arith.addf %11, %13 : vector<16x32xf32>
    %c0_11 = arith.constant 0 : index
    %c0_12 = arith.constant 0 : index
    %15 = vector.load %arg6[%c0_11, %c0_12] : memref<16x32xf32, #tpu.memory_space<vmem>>, vector<16x32xf32>
    tpu.vector_store %arg6[%c0_11, %c0_12], %14 {strides = array<i32>} : memref<16x32xf32, #tpu.memory_space<vmem>>, vector<16x32xf32>,
    return
  }
  func.func @transform_0(%arg0: i32) -> (i32, i32) {
    %c0_i32 = arith.constant 0 : i32
    %c0_i32_0 = arith.constant 0 : i32
    return %arg0, %c0_i32 : i32, i32
  }
  func.func @transform_1(%arg0: i32) -> (i32, i32) {
    %c0_i32 = arith.constant 0 : i32
    %c0_i32_0 = arith.constant 0 : i32
    %c0_i32_1 = arith.constant 0 : i32
    return %c0_i32, %c0_i32_0 : i32, i32
  }
  func.func @transform_2(%arg0: i32) -> (i32, i32) {
    %c0_i32 = arith.constant 0 : i32
    %c0_i32_0 = arith.constant 0 : i32
    %c0_i32_1 = arith.constant 0 : i32
    return %c0_i32, %c0_i32_0 : i32, i32
  }
  func.func @transform_3(%arg0: i32) -> (i32, i32) {
    %c0_i32 = arith.constant 0 : i32
    %c0_i32_0 = arith.constant 0 : i32
    %c0_i32_1 = arith.constant 0 : i32
    return %c0_i32, %c0_i32_0 : i32, i32
  }
  func.func @transform_4(%arg0: i32) -> (i32, i32) {
    %c0_i32 = arith.constant 0 : i32
    %c0_i32_0 = arith.constant 0 : i32
    %c0_i32_1 = arith.constant 0 : i32
    return %c0_i32, %c0_i32_0 : i32, i32
  }
  func.func @transform_5(%arg0: i32) -> (i32, i32) {
    %c0_i32 = arith.constant 0 : i32
    %c0_i32_0 = arith.constant 0 : i32
    return %arg0, %c0_i32 : i32, i32
  }
}

</mosaic_0001>

<llo_original>
// kernel: tpu_custom_call.1
$region0: #{tpu_custom_call.1}
  #allocation0 [shape = 'u32[]', space=smem, size = 0x4, offset = 0x4, fixed_abs, tag = 'smem constant byte address 0x4 - core index']
  #allocation1 [shape = 'u32[144,128]{1,0:T(1,128)}', space=vmem, size = 0x12000, scoped, tag = 'internal scratch']
  %s0 = inlined_call_operand.hbm [shape: f32[8,128], index: 0, kind: input, shape index: {}]
  %s1 = inlined_call_operand.hbm [shape: f32[8,128], index: 1, kind: output, shape index: {}]
  %s2 = sld [smem:[#allocation0]]
  $region18: #{tpu_custom_call.1} parent=0
    _
  %s4 = ssub.s32 1, %s2
  %s5 = scalar_select 0, %s4, %s2
  $region1: #{tpu_custom_call.1} parent=0
    #allocation2 [shape = 'u8[4096]{0}', space=vmem, size = 0x1000, scoped, tag = 'input window, operand 0, single buffered']
    #allocation3 [shape = 's32[1]{0}', space=sflag, size = 0x4, scoped, tag = 'scoped memory for tpu_custom_call.1']
    #allocation4 [shape = 's32[1]{0}', space=sflag, size = 0x4, scoped, tag = 'scoped memory for tpu_custom_call.1']
    #allocation5 [shape = 'u8[4096]{0}', space=vmem, size = 0x1000, scoped, tag = 'output window, operand 0, single buffered']
    %6 = vsyncpa [#allocation3], 0
    %7 = vsyncpa [#allocation4], 0
    // Predicated region
    $region2: #{tpu_custom_call.1} parent=1 // pred_check
      _
    $region3: #{tpu_custom_call.1} parent=1 // pred_check_branch
      %9 = sbr.rel (0) target = $region5
    $region4: #{tpu_custom_call.1} parent=1 // pred_region
      %s11 = ssub.s32 128, 128
      %12 = vsyncadd [#allocation3], %s11
      %s14 = sshll.u32 [#allocation2], 4
      %s15 = int_to_ptr.vmem [resolvable:$true] %s14
      %17 = dma.hbm_to_vmem [thread:$0]  %s0, 128, %s15, [#allocation3]
    $region5: #{tpu_custom_call.1} parent=1 // pred_fallthru
      _
    // Predicated region
    $region6: #{tpu_custom_call.1} parent=1 // pred_check
      _
    $region7: #{tpu_custom_call.1} parent=1 // pred_check_branch
      %19 = sbr.rel (0) target = $region9
    $region8: #{tpu_custom_call.1} parent=1 // pred_region
      %20 = dma.done [#allocation3], 128
    $region9: #{tpu_custom_call.1} parent=1 // pred_fallthru
      _
    %v21 = vld [vmem:[#allocation2] sm:$0xff]
    %22 = vst [vmem:[#allocation5] sm:$0xff] %v21
    // Predicated region
    $region10: #{tpu_custom_call.1} parent=1 // pred_check
      _
    $region11: #{tpu_custom_call.1} parent=1 // pred_check_branch
      %24 = sbr.rel (0) target = $region13
    $region12: #{tpu_custom_call.1} parent=1 // pred_region
      %s26 = ssub.s32 128, 128
      %27 = vsyncadd [#allocation4], %s26
      %s29 = sshll.u32 [#allocation5], 4
      %s30 = int_to_ptr.vmem [resolvable:$true] %s29
      %32 = dma.vmem_to_hbm [thread:$0]  %s30, 128, %s1, [#allocation4]
    $region13: #{tpu_custom_call.1} parent=1 // pred_fallthru
      _
    // Predicated region
    $region14: #{tpu_custom_call.1} parent=1 // pred_check
      _
    $region15: #{tpu_custom_call.1} parent=1 // pred_check_branch
      %34 = sbr.rel (0) target = $region17
    $region16: #{tpu_custom_call.1} parent=1 // pred_region
      %35 = dma.done [#allocation4], 128
    $region17: #{tpu_custom_call.1} parent=1 // pred_fallthru
      _
    %36 = vsyncpa [#allocation3], 1
    %37 = vsyncpa [#allocation4], 1

// kernel: tpu_custom_call.1
$region0: #{tpu_custom_call.1}
  #allocation0 [shape = 'u32[]', space=smem, size = 0x4, offset = 0x4, fixed_abs, tag = 'smem constant byte address 0x4 - core index']
  #allocation1 [shape = 'u32[144,128]{1,0:T(1,128)}', space=vmem, size = 0x12000, scoped, tag = 'internal scratch']
  %s0 = inlined_call_operand.vmem [shape: f32[16,32], index: 0, kind: input, shape index: {}]
  %s1 = inlined_call_operand.vmem [shape: bf16[32,64], index: 1, kind: input, shape index: {}]
  %s2 = inlined_call_operand.vmem [shape: f32[1,64], index: 2, kind: input, shape index: {}]
  %s3 = inlined_call_operand.vmem [shape: bf16[64,32], index: 3, kind: input, shape index: {}]
  %s4 = inlined_call_operand.vmem [shape: f32[1,32], index: 4, kind: input, shape index: {}]
  %s5 = inlined_call_operand.hbm [shape: f32[16,32], index: 5, kind: output, shape index: {}]
  %s6 = sld [smem:[#allocation0]]
  $region30: #{tpu_custom_call.1} parent=0
    _
  %s8 = ssub.s32 1, %s6
  %s9 = scalar_select 0, %s8, %s6
  $region1: #{tpu_custom_call.1} parent=0
    #allocation2 [shape = 'u8[8192]{0}', space=vmem, size = 0x2000, scoped, tag = 'output window, operand 0, single buffered']
    #allocation3 [shape = 's32[1]{0}', space=sflag, size = 0x4, scoped, tag = 'scoped memory for tpu_custom_call.1']
    %10 = vsyncpa [#allocation3], 0
    // Predicated region
    $region2: #{tpu_custom_call.1} parent=1 // pred_check
      _
    $region3: #{tpu_custom_call.1} parent=1 // pred_check_branch
      %12 = sbr.rel (0) target = $region5
    $region4: #{tpu_custom_call.1} parent=1 // pred_region
      _
    $region5: #{tpu_custom_call.1} parent=1 // pred_fallthru
      _
    // Predicated region
    $region6: #{tpu_custom_call.1} parent=1 // pred_check
      _
    $region7: #{tpu_custom_call.1} parent=1 // pred_check_branch
      %14 = sbr.rel (0) target = $region9
    $region8: #{tpu_custom_call.1} parent=1 // pred_region
      _
    $region9: #{tpu_custom_call.1} parent=1 // pred_fallthru
      _
    // Predicated region
    $region10: #{tpu_custom_call.1} parent=1 // pred_check
      _
    $region11: #{tpu_custom_call.1} parent=1 // pred_check_branch
      %16 = sbr.rel (0) target = $region13
    $region12: #{tpu_custom_call.1} parent=1 // pred_region
      _
    $region13: #{tpu_custom_call.1} parent=1 // pred_fallthru
      _
    // Predicated region
    $region14: #{tpu_custom_call.1} parent=1 // pred_check
      _
    $region15: #{tpu_custom_call.1} parent=1 // pred_check_branch
      %18 = sbr.rel (0) target = $region17
    $region16: #{tpu_custom_call.1} parent=1 // pred_region
      _
    $region17: #{tpu_custom_call.1} parent=1 // pred_fallthru
      _
    // Predicated region
    $region18: #{tpu_custom_call.1} parent=1 // pred_check
      _
    $region19: #{tpu_custom_call.1} parent=1 // pred_check_branch
      %20 = sbr.rel (0) target = $region21
    $region20: #{tpu_custom_call.1} parent=1 // pred_region
      _
    $region21: #{tpu_custom_call.1} parent=1 // pred_fallthru
      _
    %v22 = vld [vmem:[%s0] sm:$0xff]
    %v23 = vld [vmem:[%s0 + $0x8] sm:$0xff]
    %v24 = vpack.c.bf16 %v23, %v22
    %v25 = vld [vmem:[%s1] sm:$0xf]
    %v26 = vld [vmem:[%s1 + $0x4] sm:$0xf]
    %v27 = vld [vmem:[%s1 + $0x8] sm:$0xf]
    %v28 = vld [vmem:[%s1 + $0xc] sm:$0xf]
    %v29 = vld [vmem:[%s2] sm:$0x1]
    %v31 = vlaneseq
    %v32 = vshrl.u32 %v31, 7
    %v33 = vsub.s32 0, %v32
    %v34 = vrot.slane %v29, %v33
    %v40 = vunpack.c.l.b16 %v25
    %v41 = vunpack.c.l.b16 %v26
    %v42 = vunpack.c.l.b16 %v27
    %v43 = vunpack.c.l.b16 %v28
    %v44 = vpack.c.b16 %v41, %v40
    %v45 = vpack.c.b16 %v43, %v42
    %vm48 = vcmask 261120
    %v50 = vsel %vm48, %v24, 0
    %52 = vmatprep.subr.bf16.mxu0 0
    %53 = vmatpush1.bf16.msra.mxu0 0
    %54 = vmatprep.subr.bf16.mxu0 0
    %55 = vmatpush1.bf16.msra.mxu0 0
    %56 = vmatprep.subr.bf16.mxu0 0
    %57 = vmatpush1.bf16.msra.mxu0 0
    %58 = vmatprep.subr.bf16.mxu0 0
    %59 = vmatpush1.bf16.msra.mxu0 0
    %60 = vmatprep.subr.bf16.mxu0 0
    %61 = vmatpush1.bf16.msra.mxu0 0
    %62 = vmatprep.subr.bf16.mxu0 0
    %63 = vmatpush1.bf16.msra.mxu0 0
    %64 = vmatprep.subr.bf16.mxu0 0
    %65 = vmatpush1.bf16.msra.mxu0 %v45
    %66 = vmatprep.subr.bf16.mxu0 0
    %67 = vmatpush1.bf16.msra.mxu0 %v44
    %68 = vmatprep.subr.bf16.mxu0 0
    %69 = vmatpush2.bf16.msra.mxu0 0
    %70 = vmatprep.subr.bf16.mxu0 0
    %71 = vmatpush2.bf16.msra.mxu0 0
    %72 = vmatprep.subr.bf16.mxu0 0
    %73 = vmatpush2.bf16.msra.mxu0 0
    %74 = vmatprep.subr.bf16.mxu0 0
    %75 = vmatpush2.bf16.msra.mxu0 0
    %76 = vmatprep.subr.bf16.mxu0 0
    %77 = vmatpush2.bf16.msra.mxu0 0
    %78 = vmatprep.subr.bf16.mxu0 0
    %79 = vmatpush2.bf16.msra.mxu0 0
    %80 = vmatprep.subr.bf16.mxu0 0
    %81 = vmatpush2.bf16.msra.mxu0 0
    %82 = vmatprep.subr.bf16.mxu0 0
    %83 = vmatpush2.bf16.msra.mxu0 0
    %84 = vmatprep.mubr.bf16.mxu0 0
    %85 = vmatmul.mubr.bf16.gmra.mxu0 %v50
    %v86 = vpop.f32.mrf.mxu0
    %v87 = vadd.f32 %v34, %v86
    %v88 = vpop.f32.mrf.mxu0
    %v89 = vpop.f32.mrf.mxu0
    %v90 = vadd.f32 %v34, %v89
    %v91 = vpop.f32.mrf.mxu0
    %92 = vdwg.mxu0
    %v93 = vmax.f32 %v87, 0.0
    %v94 = vmax.f32 %v90, 0.0
    %v95 = vpack.c.bf16 %v94, %v93
    %v96 = vld [vmem:[%s3] sm:$0xf]
    %v97 = vld [vmem:[%s3 + $0x4] sm:$0xf]
    %v98 = vld [vmem:[%s3 + $0x8] sm:$0xf]
    %v99 = vld [vmem:[%s3 + $0xc] sm:$0xf]
    %v100 = vld [vmem:[%s3 + $0x10] sm:$0xf]
    %v101 = vld [vmem:[%s3 + $0x14] sm:$0xf]
    %v102 = vld [vmem:[%s3 + $0x18] sm:$0xf]
    %v103 = vld [vmem:[%s3 + $0x1c] sm:$0xf]
    %v104 = vld [vmem:[%s4] sm:$0x1]
    %v106 = vlaneseq
    %v107 = vshrl.u32 %v106, 7
    %v108 = vsub.s32 0, %v107
    %v109 = vrot.slane %v104, %v108
    %v119 = vunpack.c.l.b16 %v96
    %v120 = vunpack.c.l.b16 %v97
    %v121 = vunpack.c.l.b16 %v98
    %v122 = vunpack.c.l.b16 %v99
    %v123 = vunpack.c.l.b16 %v100
    %v124 = vunpack.c.l.b16 %v101
    %v125 = vunpack.c.l.b16 %v102
    %v126 = vunpack.c.l.b16 %v103
    %v127 = vpack.c.b16 %v120, %v119
    %v128 = vpack.c.b16 %v122, %v121
    %v129 = vpack.c.b16 %v124, %v123
    %v130 = vpack.c.b16 %v126, %v125
    %vm135 = vcmask 523264
    %v137 = vsel %vm135, %v95, 0
    %139 = vmatprep.subr.bf16.mxu0 0
    %140 = vmatpush1.bf16.msra.mxu0 0
    %141 = vmatprep.subr.bf16.mxu0 0
    %142 = vmatpush1.bf16.msra.mxu0 0
    %143 = vmatprep.subr.bf16.mxu0 0
    %144 = vmatpush1.bf16.msra.mxu0 0
    %145 = vmatprep.subr.bf16.mxu0 0
    %146 = vmatpush1.bf16.msra.mxu0 0
    %147 = vmatprep.subr.bf16.mxu0 0
    %148 = vmatpush1.bf16.msra.mxu0 %v130
    %149 = vmatprep.subr.bf16.mxu0 0
    %150 = vmatpush1.bf16.msra.mxu0 %v129
    %151 = vmatprep.subr.bf16.mxu0 0
    %152 = vmatpush1.bf16.msra.mxu0 %v128
    %153 = vmatprep.subr.bf16.mxu0 0
    %154 = vmatpush1.bf16.msra.mxu0 %v127
    %155 = vmatprep.subr.bf16.mxu0 0
    %156 = vmatpush2.bf16.msra.mxu0 0
    %157 = vmatprep.subr.bf16.mxu0 0
    %158 = vmatpush2.bf16.msra.mxu0 0
    %159 = vmatprep.subr.bf16.mxu0 0
    %160 = vmatpush2.bf16.msra.mxu0 0
    %161 = vmatprep.subr.bf16.mxu0 0
    %162 = vmatpush2.bf16.msra.mxu0 0
    %163 = vmatprep.subr.bf16.mxu0 0
    %164 = vmatpush2.bf16.msra.mxu0 0
    %165 = vmatprep.subr.bf16.mxu0 0
    %166 = vmatpush2.bf16.msra.mxu0 0
    %167 = vmatprep.subr.bf16.mxu0 0
    %168 = vmatpush2.bf16.msra.mxu0 0
    %169 = vmatprep.subr.bf16.mxu0 0
    %170 = vmatpush2.bf16.msra.mxu0 0
    %171 = vmatprep.mubr.bf16.mxu0 0
    %172 = vmatmul.mubr.bf16.gmra.mxu0 %v137
    %v173 = vpop.f32.mrf.mxu0
    %v174 = vadd.f32 %v109, %v173
    %v175 = vpop.f32.mrf.mxu0
    %v176 = vpop.f32.mrf.mxu0
    %v177 = vadd.f32 %v109, %v176
    %v178 = vpop.f32.mrf.mxu0
    %179 = vdwg.mxu0
    %180 = vst.msk [vmem:[#allocation2] sm:$0xff] %vm48, %v174
    %181 = vst.msk [vmem:[#allocation2 + $0x8] sm:$0xff] %vm48, %v177
    // Predicated region
    $region22: #{tpu_custom_call.1} parent=1 // pred_check
      _
    $region23: #{tpu_custom_call.1} parent=1 // pred_check_branch
      %183 = sbr.rel (0) target = $region25
    $region24: #{tpu_custom_call.1} parent=1 // pred_region
      %s185 = ssub.s32 256, 256
      %186 = vsyncadd [#allocation3], %s185
      %s187 = sshll.u32 [#allocation2], 4
      %s188 = int_to_ptr.vmem [resolvable:$true] %s187
      %193 = dma.vmem_to_hbm [thread:$0]  %s188, 256, %s5, [#allocation3], 128, 128, 8
    $region25: #{tpu_custom_call.1} parent=1 // pred_fallthru
      _
    // Predicated region
    $region26: #{tpu_custom_call.1} parent=1 // pred_check
      _
    $region27: #{tpu_custom_call.1} parent=1 // pred_check_branch
      %195 = sbr.rel (0) target = $region29
    $region28: #{tpu_custom_call.1} parent=1 // pred_region
      %196 = dma.done [#allocation3], 256
    $region29: #{tpu_custom_call.1} parent=1 // pred_fallthru
      _
    %197 = vsyncpa [#allocation3], 1

</llo_original>
